<compile_context>
chip_gen: v7x
topology: tpu7x:2x2x1
jax: 0.10.0
libtpu: 0.0.40
codegen_flags: <defaults>
</compile_context>

<pallas_src>
import functools

import jax
import jax.numpy as jnp
from jax import lax
from jax.experimental import pallas as pl
from jax.experimental.pallas import tpu as pltpu

_MAX_TILE_ROWS = 512      # 512*1024*4B = 2 MiB per f32 buffer (8 MiB total with
                          # 2x in + 2x out double buffers) -> fits v5e scoped VMEM.
_TARGET_GRID_STEPS = 8    # keep several grid steps for megacore + DMA overlap.
_LANE_CHOICES = (1024, 512, 256, 128)


def _dropout_kernel(seed_ref, x_ref, o_ref, *, threshold, scale,
                    tile_rows, lanes):
    """Elementwise dropout on one (tile_rows, lanes) tile.

    Randomness: global flat element index -> murmur3 fmix32 finalizer.
    The seed is pre-mixed on the scalar unit, so per-element VPU cost is the
    counter (shift|or + add), fmix32 (8 ops), the compare and the select.
    """
    i = pl.program_id(0)
    shape = (tile_rows, lanes)
    shift = lanes.bit_length() - 1          # lanes is a power of two

    # Scalar-side seed mix (scalar unit; effectively free next to the VPU).
    s = seed_ref[0].astype(jnp.uint32)
    s = s ^ (s >> 16)
    s = s * jnp.uint32(0x7FEB352D)
    s = s ^ (s >> 15)
    s = s * jnp.uint32(0x846CA68B)
    s = s ^ (s >> 16)
    base = (i * (tile_rows * lanes)).astype(jnp.uint32) + s

    # Per-element linear counter: one shift + one or + one (broadcast) add.
    row = lax.broadcasted_iota(jnp.int32, shape, 0).astype(jnp.uint32)
    col = lax.broadcasted_iota(jnp.int32, shape, 1).astype(jnp.uint32)
    h = ((row << shift) | col) + base

    # fmix32 finalizer: full avalanche.
    h = h ^ (h >> 16)
    h = h * jnp.uint32(0x85EBCA6B)
    h = h ^ (h >> 13)
    h = h * jnp.uint32(0xC2B2AE35)
    h = h ^ (h >> 16)

    # keep with probability 1 - p :  uniform uint32 >= round(p * 2^32)
    keep = h >= jnp.uint32(threshold)

    # TODO(synk): for bf16/int8 inputs derive 2/4 keep decisions per 32-bit
    # hash (16/8-bit field compares) and build the mask directly in the packed
    # sublane layout to cut the VALU work further on v6e/v7x.
    x = x_ref[...]
    scaled = x * jnp.asarray(scale, dtype=x_ref.dtype)   # native-dtype compute
    o_ref[...] = jnp.where(keep, scaled, jnp.zeros_like(scaled))


def _choose_tile_rows(rows):
    """Sublane-aligned tile height targeting >= _TARGET_GRID_STEPS grid steps."""
    if rows <= 8:
        return rows                              # single full-extent block
    tr = pl.cdiv(rows, _TARGET_GRID_STEPS)
    tr = ((tr + 7) // 8) * 8                     # multiple of 8 (sublane)
    return min(tr, _MAX_TILE_ROWS)


def _dropout_2d(x2, seed_arr, *, threshold, scale, alias):
    rows, lanes = x2.shape
    tile_rows = _choose_tile_rows(rows)
    grid = (pl.cdiv(rows, tile_rows),)           # partial last block is masked

    kernel = functools.partial(
        _dropout_kernel, threshold=threshold, scale=scale,
        tile_rows=tile_rows, lanes=lanes)

    return pl.pallas_call(
        kernel,
        out_shape=jax.ShapeDtypeStruct((rows, lanes), x2.dtype),
        grid=grid,
        in_specs=[
            pl.BlockSpec(memory_space=pltpu.MemorySpace.SMEM),      # seed
            pl.BlockSpec((tile_rows, lanes), lambda i: (i, 0)),     # x tile
        ],
        out_specs=pl.BlockSpec((tile_rows, lanes), lambda i: (i, 0)),
        # Alias only when the caller donated its buffer; aliasing a
        # non-donatable input would force XLA to insert a defensive copy.
        input_output_aliases=({1: 0} if alias else {}),
        compiler_params=pltpu.CompilerParams(
            dimension_semantics=("parallel",)),
    )(seed_arr, x2)


def _dropout_impl(x, seed, *, p, alias):
    orig_shape = x.shape
    n = x.size
    seed_arr = jnp.asarray(seed, dtype=jnp.int32).reshape((1,))
    threshold = min(int(round(float(p) * 2.0 ** 32)), 2 ** 32 - 1)
    scale = float(1.0 / (1.0 - float(p)))

    flat = x.reshape(-1)                         # bitcast under jit; no HBM pass

    # Fast path: widest lane count that divides n -> pure reshape, no padding.
    for lanes in _LANE_CHOICES:
        if n % lanes == 0:
            out2 = _dropout_2d(flat.reshape(n // lanes, lanes), seed_arr,
                               threshold=threshold, scale=scale, alias=alias)
            return out2.reshape(orig_shape)

    # Ragged fallback (n not a multiple of 128): pad once to a lane-dense slab.
    # TODO(synk): handle the ragged tail with a masked partial last block
    # instead of the pad + slice round trip.
    lanes = _LANE_CHOICES[0]
    n_pad = pl.cdiv(n, lanes) * lanes
    flat = jnp.pad(flat, (0, n_pad - n))
    out2 = _dropout_2d(flat.reshape(n_pad // lanes, lanes), seed_arr,
                       threshold=threshold, scale=scale, alias=alias)
    return out2.reshape(-1)[:n].reshape(orig_shape)


@functools.partial(jax.jit, static_argnames=("p",))
def _dropout_jit(x, seed, *, p):
    return _dropout_impl(x, seed, p=p, alias=False)


@functools.partial(jax.jit, static_argnames=("p",), donate_argnums=(0,))
def _dropout_jit_donated(x, seed, *, p):
    return _dropout_impl(x, seed, p=p, alias=True)


def dropout(x, *, p, seed, training=True, donate=False):
    """Pallas TPU dropout matching torch.nn.Dropout(p) forward semantics.

    Any shape / floating dtype. Eval mode (training=False) is the identity.
    Pass donate=True when the caller no longer needs `x`; the kernel then
    writes in place over the input's HBM buffer (buffer donation + aliasing).
    Vary `seed` per call/layer — the mask stream is keyed on (seed, index).
    """
    p = float(p)
    if (not training) or p == 0.0 or x.size == 0:
        return x
    if p >= 1.0:
        # All elements dropped; avoid inf scale.
        return jnp.zeros_like(x)
    fn = _dropout_jit_donated if donate else _dropout_jit
    return fn(x, seed, p=p)


if __name__ == "__main__":
    key = jax.random.PRNGKey(0)
    x = jax.random.normal(key, (2, 4, 16, 16), dtype=jnp.float32)
    p = 0.25
    scale = jnp.float32(1.0 / (1.0 - p))

    # Training mode: survivors are exactly x/(1-p), the rest exactly zero.
    y = jax.block_until_ready(dropout(x, p=p, seed=42, training=True))
    assert y.shape == x.shape and y.dtype == x.dtype
    kept = y != 0.0
    assert jnp.allclose(jnp.where(kept, y, 0.0),
                        jnp.where(kept, x * scale, 0.0),
                        rtol=1e-6, atol=1e-6)
    frac_dropped = 1.0 - jnp.mean(kept.astype(jnp.float32))
    assert 0.05 < float(frac_dropped) < 0.55      # loose statistical check

    # Ragged element count (105): exercises the pad-fallback path.
    x_r = jax.random.normal(jax.random.PRNGKey(1), (3, 5, 7), dtype=jnp.float32)
    y_r = jax.block_until_ready(dropout(x_r, p=p, seed=7, training=True))
    assert y_r.shape == x_r.shape and y_r.dtype == x_r.dtype
    kept_r = y_r != 0.0
    assert jnp.allclose(jnp.where(kept_r, y_r, 0.0),
                        jnp.where(kept_r, x_r * scale, 0.0),
                        rtol=1e-6, atol=1e-6)

    # Donated / in-place path (caller gives up its buffer).
    x_d = x + 0.0
    y_d = jax.block_until_ready(
        dropout(x_d, p=p, seed=3, training=True, donate=True))
    assert y_d.shape == x.shape and y_d.dtype == x.dtype

    # Eval mode is the identity.
    y_eval = jax.block_until_ready(dropout(x, p=p, seed=42, training=False))
    assert jnp.array_equal(y_eval, x)

    print("KERNEL_OK")
</pallas_src>

<mosaic_0001>
module attributes {stable_mosaic.version = 11 : i64} {
  func.func @_dropout_kernel(%arg0: i32, %arg1: memref<1xi32, #tpu.memory_space<smem>>, %arg2: memref<2x1024xf32, #tpu.memory_space<vmem>>, %arg3: memref<2x1024xf32, #tpu.memory_space<vmem>>) attributes {dimension_semantics = [#tpu.dimension_semantics<parallel>], iteration_bounds = array<i64: 1>, scalar_prefetch = 0 : i64, scratch_operands = 0 : i64, tpu.core_type = #tpu.core_type<tc>, window_params = [{transform_indices = @transform_0, window_bounds = array<i64: 1>}, {transform_indices = @transform_1, window_bounds = array<i64: 2, 1024>}, {transform_indices = @transform_2, window_bounds = array<i64: 2, 1024>}]} {
    %c0 = arith.constant 0 : index
    %0 = memref.load %arg1[%c0] : memref<1xi32, #tpu.memory_space<smem>>
    %c16_i32 = arith.constant 16 : i32
    %1 = arith.shrui %0, %c16_i32 : i32
    %2 = arith.xori %0, %1 : i32
    %c2146121005_i32 = arith.constant 2146121005 : i32
    %3 = arith.muli %2, %c2146121005_i32 : i32
    %c15_i32 = arith.constant 15 : i32
    %4 = arith.shrui %3, %c15_i32 : i32
    %5 = arith.xori %3, %4 : i32
    %c-2073254261_i32 = arith.constant -2073254261 : i32
    %6 = arith.muli %5, %c-2073254261_i32 : i32
    %c16_i32_0 = arith.constant 16 : i32
    %7 = arith.shrui %6, %c16_i32_0 : i32
    %8 = arith.xori %6, %7 : i32
    %c2048_i32 = arith.constant 2048 : i32
    %9 = arith.muli %arg0, %c2048_i32 : i32
    %10 = arith.addi %9, %8 : i32
    %11 = tpu.iota {dimensions = array<i32: 0>} : vector<2x1024xi32>
    %12 = tpu.iota {dimensions = array<i32: 1>} : vector<2x1024xi32>
    %c10_i32 = arith.constant 10 : i32
    %13 = vector.broadcast %c10_i32 : i32 to vector<2x1024xi32>
    %14 = arith.shli %11, %13 : vector<2x1024xi32>
    %15 = arith.ori %14, %12 : vector<2x1024xi32>
    %16 = vector.broadcast %10 : i32 to vector<2x1024xi32>
    %17 = arith.addi %15, %16 : vector<2x1024xi32>
    %c16_i32_1 = arith.constant 16 : i32
    %18 = vector.broadcast %c16_i32_1 : i32 to vector<2x1024xi32>
    %19 = arith.shrui %17, %18 : vector<2x1024xi32>
    %20 = arith.xori %17, %19 : vector<2x1024xi32>
    %c-2048144789_i32 = arith.constant -2048144789 : i32
    %21 = vector.broadcast %c-2048144789_i32 : i32 to vector<2x1024xi32>
    %22 = arith.muli %20, %21 : vector<2x1024xi32>
    %c13_i32 = arith.constant 13 : i32
    %23 = vector.broadcast %c13_i32 : i32 to vector<2x1024xi32>
    %24 = arith.shrui %22, %23 : vector<2x1024xi32>
    %25 = arith.xori %22, %24 : vector<2x1024xi32>
    %c-1028477387_i32 = arith.constant -1028477387 : i32
    %26 = vector.broadcast %c-1028477387_i32 : i32 to vector<2x1024xi32>
    %27 = arith.muli %25, %26 : vector<2x1024xi32>
    %c16_i32_2 = arith.constant 16 : i32
    %28 = vector.broadcast %c16_i32_2 : i32 to vector<2x1024xi32>
    %29 = arith.shrui %27, %28 : vector<2x1024xi32>
    %30 = arith.xori %27, %29 : vector<2x1024xi32>
    %c1073741824_i32 = arith.constant 1073741824 : i32
    %31 = vector.broadcast %c1073741824_i32 : i32 to vector<2x1024xi32>
    %32 = arith.cmpi uge, %30, %31 : vector<2x1024xi32>
    %c0_3 = arith.constant 0 : index
    %c0_4 = arith.constant 0 : index
    %33 = vector.load %arg2[%c0_3, %c0_4] : memref<2x1024xf32, #tpu.memory_space<vmem>>, vector<2x1024xf32>
    %cst = arith.constant 1.33333337 : f32
    %34 = vector.broadcast %cst : f32 to vector<2x1024xf32>
    %35 = arith.mulf %33, %34 : vector<2x1024xf32>
    %cst_5 = arith.constant 0.000000e+00 : f32
    %36 = vector.broadcast %cst_5 : f32 to vector<2x1024xf32>
    %37 = arith.select %32, %35, %36 : vector<2x1024xi1>, vector<2x1024xf32>
    %c0_6 = arith.constant 0 : index
    %c0_7 = arith.constant 0 : index
    %38 = vector.load %arg3[%c0_6, %c0_7] : memref<2x1024xf32, #tpu.memory_space<vmem>>, vector<2x1024xf32>
    tpu.vector_store %arg3[%c0_6, %c0_7], %37 {strides = array<i32>} : memref<2x1024xf32, #tpu.memory_space<vmem>>, vector<2x1024xf32>,
    return
  }
  func.func @transform_0(%arg0: i32) -> i32 {
    %c0_i32 = arith.constant 0 : i32
    %c0_i32_0 = arith.constant 0 : i32
    return %c0_i32 : i32
  }
  func.func @transform_1(%arg0: i32) -> (i32, i32) {
    %c0_i32 = arith.constant 0 : i32
    %c0_i32_0 = arith.constant 0 : i32
    return %arg0, %c0_i32 : i32, i32
  }
  func.func @transform_2(%arg0: i32) -> (i32, i32) {
    %c0_i32 = arith.constant 0 : i32
    %c0_i32_0 = arith.constant 0 : i32
    return %arg0, %c0_i32 : i32, i32
  }
}

</mosaic_0001>

<llo_original>
// kernel: _dropout_jit.1
$region0: #{_dropout_jit.1}
  #allocation0 [shape = 'u32[]', space=smem, size = 0x4, offset = 0x4, fixed_abs, tag = 'smem constant byte address 0x4 - core index']
  #allocation1 [shape = 'u32[144,128]{1,0:T(1,128)}', space=vmem, size = 0x12000, scoped, tag = 'internal scratch']
  #allocation2 [shape = 's32[1]{0:T(128)S(6)}', space=smem, size = 0x200, scoped, tag = 'scoped memory for _dropout_jit.1']
  %s0 = inlined_call_operand.<no memory space> [shape: s32[1], index: 0, kind: input, shape index: {}]
  %s1 = inlined_call_operand.vmem [shape: f32[2,1024], index: 1, kind: input, shape index: {}]
  %s2 = inlined_call_operand.vmem [shape: f32[2,1024], index: 2, kind: output, shape index: {}]
  %s3 = sld [smem:[#allocation0]]
  $region18: #{_dropout_jit.1} parent=0
    _
  %s5 = ssub.s32 1, %s3
  %s6 = scalar_select 0, %s5, %s3
  %7 = sst [smem:[#allocation2]] %s0
  // Predicated region
  $region2: #{_dropout_jit.1} parent=0 // pred_check
    _
  $region3: #{_dropout_jit.1} parent=0 // pred_check_branch
    %9 = sbr.rel (0) target = $region5
  $region4: #{_dropout_jit.1} parent=0 // pred_region
    _
  $region5: #{_dropout_jit.1} parent=0 // pred_fallthru
    _
  // Predicated region
  $region6: #{_dropout_jit.1} parent=0 // pred_check
    _
  $region7: #{_dropout_jit.1} parent=0 // pred_check_branch
    %11 = sbr.rel (0) target = $region9
  $region8: #{_dropout_jit.1} parent=0 // pred_region
    _
  $region9: #{_dropout_jit.1} parent=0 // pred_fallthru
    _
  %s12 = sld [smem:[#allocation2]]
  %s13 = sshrl.u32 %s12, 16
  %s14 = sxor.u32 %s12, %s13
  %s15 = smul.u32 %s14, 2146121005
  %s16 = sshrl.u32 %s15, 15
  %s17 = sxor.u32 %s15, %s16
  %s18 = smul.u32 %s17, 2221713035
  %s19 = sshrl.u32 %s18, 16
  %s20 = sxor.u32 %s18, %s19
  %s21 = smul.u32 0, 2048
  %s22 = sadd.s32 %s21, %s20
  %v23 = vlaneseq
  %v24 = vshrl.u32 %v23, 7
  %v25 = vlaneseq
  %v26 = vand.u32 %v25, 127
  %v27 = vadd.s32 %v26, 128
  %v28 = vadd.s32 %v26, 256
  %v29 = vadd.s32 %v26, 384
  %v30 = vadd.s32 %v26, 512
  %v31 = vadd.s32 %v26, 640
  %v32 = vadd.s32 %v26, 768
  %v33 = vadd.s32 %v26, 896
  %v34 = vshll.u32 %v24, 10
  %v35 = vor.u32 %v34, %v26
  %v36 = vor.u32 %v34, %v27
  %v37 = vor.u32 %v34, %v28
  %v38 = vor.u32 %v34, %v29
  %v39 = vor.u32 %v34, %v30
  %v40 = vor.u32 %v34, %v31
  %v41 = vor.u32 %v34, %v32
  %v42 = vor.u32 %v34, %v33
  %v43 = vstv %s22
  %v44 = vadd.s32 %v35, %v43
  %v45 = vadd.s32 %v36, %v43
  %v46 = vadd.s32 %v37, %v43
  %v47 = vadd.s32 %v38, %v43
  %v48 = vadd.s32 %v39, %v43
  %v49 = vadd.s32 %v40, %v43
  %v50 = vadd.s32 %v41, %v43
  %v51 = vadd.s32 %v42, %v43
  %v52 = vshrl.u32 %v44, 16
  %v53 = vshrl.u32 %v45, 16
  %v54 = vshrl.u32 %v46, 16
  %v55 = vshrl.u32 %v47, 16
  %v56 = vshrl.u32 %v48, 16
  %v57 = vshrl.u32 %v49, 16
  %v58 = vshrl.u32 %v50, 16
  %v59 = vshrl.u32 %v51, 16
  %v60 = vxor.u32 %v44, %v52
  %v61 = vxor.u32 %v45, %v53
  %v62 = vxor.u32 %v46, %v54
  %v63 = vxor.u32 %v47, %v55
  %v64 = vxor.u32 %v48, %v56
  %v65 = vxor.u32 %v49, %v57
  %v66 = vxor.u32 %v50, %v58
  %v67 = vxor.u32 %v51, %v59
  %v68 = vmul.u32 %v60, 2246822507
  %v69 = vmul.u32 %v61, 2246822507
  %v70 = vmul.u32 %v62, 2246822507
  %v71 = vmul.u32 %v63, 2246822507
  %v72 = vmul.u32 %v64, 2246822507
  %v73 = vmul.u32 %v65, 2246822507
  %v74 = vmul.u32 %v66, 2246822507
  %v75 = vmul.u32 %v67, 2246822507
  %v76 = vshrl.u32 %v68, 13
  %v77 = vshrl.u32 %v69, 13
  %v78 = vshrl.u32 %v70, 13
  %v79 = vshrl.u32 %v71, 13
  %v80 = vshrl.u32 %v72, 13
  %v81 = vshrl.u32 %v73, 13
  %v82 = vshrl.u32 %v74, 13
  %v83 = vshrl.u32 %v75, 13
  %v84 = vxor.u32 %v68, %v76
  %v85 = vxor.u32 %v69, %v77
  %v86 = vxor.u32 %v70, %v78
  %v87 = vxor.u32 %v71, %v79
  %v88 = vxor.u32 %v72, %v80
  %v89 = vxor.u32 %v73, %v81
  %v90 = vxor.u32 %v74, %v82
  %v91 = vxor.u32 %v75, %v83
  %v92 = vmul.u32 %v84, 3266489909
  %v93 = vmul.u32 %v85, 3266489909
  %v94 = vmul.u32 %v86, 3266489909
  %v95 = vmul.u32 %v87, 3266489909
  %v96 = vmul.u32 %v88, 3266489909
  %v97 = vmul.u32 %v89, 3266489909
  %v98 = vmul.u32 %v90, 3266489909
  %v99 = vmul.u32 %v91, 3266489909
  %v100 = vshrl.u32 %v92, 16
  %v101 = vshrl.u32 %v93, 16
  %v102 = vshrl.u32 %v94, 16
  %v103 = vshrl.u32 %v95, 16
  %v104 = vshrl.u32 %v96, 16
  %v105 = vshrl.u32 %v97, 16
  %v106 = vshrl.u32 %v98, 16
  %v107 = vshrl.u32 %v99, 16
  %v108 = vxor.u32 %v92, %v100
  %v109 = vxor.u32 %v93, %v101
  %v110 = vxor.u32 %v94, %v102
  %v111 = vxor.u32 %v95, %v103
  %v112 = vxor.u32 %v96, %v104
  %v113 = vxor.u32 %v97, %v105
  %v114 = vxor.u32 %v98, %v106
  %v115 = vxor.u32 %v99, %v107
  %vm116 = vcmp.ge.u32.totalorder %v108, 1073741824
  %vm117 = vcmp.ge.u32.totalorder %v109, 1073741824
  %vm118 = vcmp.ge.u32.totalorder %v110, 1073741824
  %vm119 = vcmp.ge.u32.totalorder %v111, 1073741824
  %vm120 = vcmp.ge.u32.totalorder %v112, 1073741824
  %vm121 = vcmp.ge.u32.totalorder %v113, 1073741824
  %vm122 = vcmp.ge.u32.totalorder %v114, 1073741824
  %vm123 = vcmp.ge.u32.totalorder %v115, 1073741824
  %v124 = vld [vmem:[%s1] sm:$0xff]
  %v125 = vld [vmem:[%s1 + $0x8] sm:$0xff]
  %v126 = vmul.f32 %v124, 1.3333334
  %v127 = vmul.f32 %v125, 1.3333334
  %v130 = vcombine.high %v126, %v126
  %v132 = vunpack.c.l.s4 1983009808
  %v133 = vunpack.c.0.s8 %v132
  %v134 = vlaneseq
  %v135 = vshrl.u32 %v134, 7
  %v136 = vsub.s32 %v133, %v135
  %v137 = vrot.slane %v126, %v136
  %v139 = vunpack.c.l.s4 1983009808
  %v140 = vunpack.c.0.s8 %v139
  %v141 = vlaneseq
  %v142 = vshrl.u32 %v141, 7
  %v143 = vsub.s32 %v140, %v142
  %v144 = vrot.slane %v130, %v143
  %v145 = vcombine.high %v137, %v137
  %v146 = vcombine.high %v144, %v144
  %v147 = vcombine.high %v127, %v127
  %v149 = vunpack.c.l.s4 1983009808
  %v150 = vunpack.c.0.s8 %v149
  %v151 = vlaneseq
  %v152 = vshrl.u32 %v151, 7
  %v153 = vsub.s32 %v150, %v152
  %v154 = vrot.slane %v127, %v153
  %v156 = vunpack.c.l.s4 1983009808
  %v157 = vunpack.c.0.s8 %v156
  %v158 = vlaneseq
  %v159 = vshrl.u32 %v158, 7
  %v160 = vsub.s32 %v157, %v159
  %v161 = vrot.slane %v147, %v160
  %v162 = vcombine.high %v154, %v154
  %v163 = vcombine.high %v161, %v161
  %v172 = vsel %vm116, %v137, 0.0
  %v173 = vsel %vm117, %v145, 0.0
  %v174 = vsel %vm118, %v144, 0.0
  %v175 = vsel %vm119, %v146, 0.0
  %v176 = vsel %vm120, %v154, 0.0
  %v177 = vsel %vm121, %v162, 0.0
  %v178 = vsel %vm122, %v161, 0.0
  %v179 = vsel %vm123, %v163, 0.0
  %v188 = vcombine.low %v172, %v173
  %v189 = vcombine.low %v174, %v175
  %v191 = vunpack.c.l.s4 1983009808
  %v192 = vunpack.c.0.s8 %v191
  %v193 = vlaneseq
  %v194 = vshrl.u32 %v193, 7
  %v195 = vsub.s32 %v192, %v194
  %v196 = vrot.slane %v188, %v195
  %v198 = vunpack.c.l.s4 1983009808
  %v199 = vunpack.c.0.s8 %v198
  %v200 = vlaneseq
  %v201 = vshrl.u32 %v200, 7
  %v202 = vsub.s32 %v199, %v201
  %v203 = vrot.slane %v189, %v202
  %v204 = vcombine.low %v196, %v203
  %v205 = vcombine.low %v176, %v177
  %v206 = vcombine.low %v178, %v179
  %v208 = vunpack.c.l.s4 1983009808
  %v209 = vunpack.c.0.s8 %v208
  %v210 = vlaneseq
  %v211 = vshrl.u32 %v210, 7
  %v212 = vsub.s32 %v209, %v211
  %v213 = vrot.slane %v205, %v212
  %v215 = vunpack.c.l.s4 1983009808
  %v216 = vunpack.c.0.s8 %v215
  %v217 = vlaneseq
  %v218 = vshrl.u32 %v217, 7
  %v219 = vsub.s32 %v216, %v218
  %v220 = vrot.slane %v206, %v219
  %v221 = vcombine.low %v213, %v220
  %224 = vst [vmem:[%s2] sm:$0xff] %v204
  %225 = vst [vmem:[%s2 + $0x8] sm:$0xff] %v221
  // Predicated region
  $region10: #{_dropout_jit.1} parent=0 // pred_check
    _
  $region11: #{_dropout_jit.1} parent=0 // pred_check_branch
    %227 = sbr.rel (0) target = $region13
  $region12: #{_dropout_jit.1} parent=0 // pred_region
    _
  $region13: #{_dropout_jit.1} parent=0 // pred_fallthru
    _
  // Predicated region
  $region14: #{_dropout_jit.1} parent=0 // pred_check
    _
  $region15: #{_dropout_jit.1} parent=0 // pred_check_branch
    %229 = sbr.rel (0) target = $region17
  $region16: #{_dropout_jit.1} parent=0 // pred_region
    _
  $region17: #{_dropout_jit.1} parent=0 // pred_fallthru
    _

</llo_original>
